<compile_context>
chip_gen: v7x
topology: tpu7x:2x2x1
jax: 0.10.0
libtpu: 0.0.40
codegen_flags: <defaults>
</compile_context>

<pallas_src>
import functools
import math

import jax
import jax.numpy as jnp
from jax import lax
from jax.experimental import pallas as pl
from jax.experimental.pallas import tpu as pltpu

NEG_INF = -1e30  # large finite negative -> no NaN for fully-masked rows


def _device_kind() -> str:
    try:
        return jax.devices()[0].device_kind.lower()
    except Exception:
        return ""


_IS_V5 = "v5" in _device_kind()

if _IS_V5:
    # v5e: 4x128^2 MXU, 1 vst slot, lowest HBM BW -> 128-wide output tiles,
    # larger tq to cut K/V re-read traffic (which scales with Sq/tq).
    LIN_TM, LIN_TN, LIN_TK = 128, 128, 512
    ATT_TQ, ATT_TKV = 256, 256
else:
    # v6e/v7x: 2x256^2 MXU -> 256-wide linear tiles; larger kv tile amortizes the
    # per-step online-softmax rescale. K/V blocks at tkv=512, H=1024:
    # 2 arrays x 2 buffers x 2 MiB = 8 MiB -> comfortably inside v7x's 64 MiB.
    LIN_TM, LIN_TN, LIN_TK = 256, 256, 512
    ATT_TQ, ATT_TKV = 128, 512


def _tile(dim: int, preferred: int, multiple: int) -> int:
    """Largest block size <= `preferred` that divides `dim` and is a multiple of
    `multiple` (the TPU (8,128) layout rule for the relevant axis). Falls back
    to the full dimension (always layout-legal) only if no such divisor exists."""
    if dim <= preferred:
        return dim
    start = (preferred // multiple) * multiple
    for t in range(start, 0, -multiple):
        if dim % t == 0:
            return t
    return dim


# ----------------------------------------------------------------------------
# Tiled linear kernels:  o = x @ w_t + b     (w_t is already (In, Out))
# ----------------------------------------------------------------------------
def _linear_kernel_accum(x_ref, w_ref, b_ref, o_ref, *, compute_dtype):
    """f32 output: accumulate directly into the k-resident output block."""
    kk = pl.program_id(2)

    @pl.when(kk == 0)
    def _init():
        o_ref[...] = jnp.zeros_like(o_ref)

    o_ref[...] += jnp.dot(
        x_ref[...].astype(compute_dtype),
        w_ref[...].astype(compute_dtype),
        preferred_element_type=jnp.float32,
    )

    @pl.when(kk == pl.num_programs(2) - 1)
    def _bias():
        o_ref[...] += b_ref[...]


def _linear_kernel_scratch(x_ref, w_ref, b_ref, o_ref, acc_ref, *, compute_dtype):
    """non-f32 output: f32 VMEM accumulator, cast+flush at the last k step."""
    kk = pl.program_id(2)

    @pl.when(kk == 0)
    def _init():
        acc_ref[...] = jnp.zeros_like(acc_ref)

    acc_ref[...] += jnp.dot(
        x_ref[...].astype(compute_dtype),
        w_ref[...].astype(compute_dtype),
        preferred_element_type=jnp.float32,
    )

    @pl.when(kk == pl.num_programs(2) - 1)
    def _flush():
        o_ref[...] = (acc_ref[...] + b_ref[...]).astype(o_ref.dtype)


def pallas_linear(x2d, w_t, b, *, compute_dtype=jnp.float32,
                  tm=None, tn=None, tk=None):
    """x2d: (M, In); w_t: (In, Out) = pre-transposed nn.Linear weight; b: (Out,)."""
    M, K = x2d.shape
    K2, N = w_t.shape
    assert K == K2 and b.shape == (N,)
    tm = _tile(M, tm or LIN_TM, 8)
    tn = _tile(N, tn or LIN_TN, 128)
    tk = _tile(K, tk or LIN_TK, 128)
    grid = (M // tm, N // tn, K // tk)

    if x2d.dtype == jnp.float32:
        kernel = functools.partial(_linear_kernel_accum, compute_dtype=compute_dtype)
        scratch = []
    else:
        kernel = functools.partial(_linear_kernel_scratch, compute_dtype=compute_dtype)
        scratch = [pltpu.VMEM((tm, tn), jnp.float32)]

    return pl.pallas_call(
        kernel,
        out_shape=jax.ShapeDtypeStruct((M, N), x2d.dtype),
        grid=grid,
        in_specs=[
            pl.BlockSpec((tm, tk), lambda i, j, k: (i, k)),
            pl.BlockSpec((tk, tn), lambda i, j, k: (k, j)),
            pl.BlockSpec((1, tn), lambda i, j, k: (0, j)),
        ],
        out_specs=pl.BlockSpec((tm, tn), lambda i, j, k: (i, j)),
        scratch_shapes=scratch,
        compiler_params=pltpu.CompilerParams(
            dimension_semantics=("parallel", "parallel", "arbitrary")),
    )(x2d, w_t, b.reshape(1, N))


# ----------------------------------------------------------------------------
# Attention kernel #1: flash-style (Sk-tiled online softmax) -> context + LSE
# ----------------------------------------------------------------------------
def _mha_flash_kernel(*refs, num_heads, head_size, compute_dtype, has_bias):
    # q_ref: (1, TQ, H); k_ref/v_ref: (1, TKV, H); bias_ref: (1, 1, TKV) [optional]
    # o_ref: (1, TQ, H) merged-head; lse_ref: (1, TQ, num_heads)
    # scratch: m/l (num_heads, TQ, 1) f32, acc (num_heads, TQ, head_size) f32
    if has_bias:
        q_ref, k_ref, v_ref, bias_ref, o_ref, lse_ref, m_sc, l_sc, acc_sc = refs
        bias = bias_ref[0]                      # (1, TKV): 0 keep / NEG_INF masked
    else:
        q_ref, k_ref, v_ref, o_ref, lse_ref, m_sc, l_sc, acc_sc = refs
        bias = None
    ki = pl.program_id(2)

    @pl.when(ki == 0)
    def _init():
        m_sc[...] = jnp.full_like(m_sc, NEG_INF)
        l_sc[...] = jnp.zeros_like(l_sc)
        acc_sc[...] = jnp.zeros_like(acc_sc)

    D = head_size
    dn = (((1,), (1,)), ((), ()))               # contract last dims: q @ k^T, no .T

    # Static unroll over heads (typical 4-16). If a bundle dump shows vld/vst
    # saturation from spills, reduce TKV or switch to lax.fori_loop over heads.
    for h in range(num_heads):
        sl = slice(h * D, (h + 1) * D)
        q_h = q_ref[0, :, sl].astype(compute_dtype)     # (TQ, D); scale pre-folded
        k_h = k_ref[0, :, sl].astype(compute_dtype)     # (TKV, D)
        v_h = v_ref[0, :, sl].astype(compute_dtype)     # (TKV, D)

        s = lax.dot_general(q_h, k_h, dn, preferred_element_type=jnp.float32)
        if bias is not None:
            s = s + bias                                # (TQ, TKV)

        m_prev = m_sc[h]                                # (TQ, 1)
        m_new = jnp.maximum(m_prev, jnp.max(s, axis=-1, keepdims=True))
        alpha = jnp.exp(m_prev - m_new)
        p = jnp.exp(s - m_new)
        l_sc[h] = alpha * l_sc[h] + jnp.sum(p, axis=-1, keepdims=True)
        acc_sc[h] = alpha * acc_sc[h] + jnp.dot(
            p.astype(compute_dtype), v_h, preferred_element_type=jnp.float32)
        m_sc[h] = m_new

    @pl.when(ki == pl.num_programs(2) - 1)
    def _flush():
        for h in range(num_heads):
            ctx_h = acc_sc[h] * pl.reciprocal(l_sc[h], approx=True)
            o_ref[0, :, h * D:(h + 1) * D] = ctx_h.astype(o_ref.dtype)
        m_all = m_sc[...][..., 0]                       # (num_heads, TQ)
        l_all = l_sc[...][..., 0]
        lse_ref[0] = (m_all + jnp.log(l_all)).T         # (TQ, num_heads)


def pallas_attention_flash(q_in, k_in, v_in, bias, *, num_heads, head_size,
                           compute_dtype=jnp.float32, tq=None, tkv=None):
    """q_in/k_in/v_in: (array (B, S, n*H), col) -- the projection occupies
    columns [col*H, (col+1)*H). bias: (B, 1, Sk) additive bias or None.
    Returns (context (B, Sq, H), lse (B, Sq, num_heads))."""
    q_arr, q_col = q_in
    k_arr, k_col = k_in
    v_arr, v_col = v_in
    B, Sq = q_arr.shape[0], q_arr.shape[1]
    Sk = k_arr.shape[1]
    H = num_heads * head_size
    tq = _tile(Sq, tq or ATT_TQ, 8)
    tkv = _tile(Sk, tkv or ATT_TKV, 128)
    grid = (B, Sq // tq, Sk // tkv)
    has_bias = bias is not None

    kernel = functools.partial(
        _mha_flash_kernel, num_heads=num_heads, head_size=head_size,
        compute_dtype=compute_dtype, has_bias=has_bias)

    in_specs = [
        pl.BlockSpec((1, tq, H), lambda b, qi, ki, c=q_col: (b, qi, c)),
        pl.BlockSpec((1, tkv, H), lambda b, qi, ki, c=k_col: (b, ki, c)),
        pl.BlockSpec((1, tkv, H), lambda b, qi, ki, c=v_col: (b, ki, c)),
    ]
    inputs = [q_arr, k_arr, v_arr]
    if has_bias:
        in_specs.append(pl.BlockSpec((1, 1, tkv), lambda b, qi, ki: (b, 0, ki)))
        inputs.append(bias)

    return pl.pallas_call(
        kernel,
        out_shape=(
            jax.ShapeDtypeStruct((B, Sq, H), q_arr.dtype),
            jax.ShapeDtypeStruct((B, Sq, num_heads), jnp.float32),
        ),
        grid=grid,
        in_specs=in_specs,
        out_specs=(
            pl.BlockSpec((1, tq, H), lambda b, qi, ki: (b, qi, 0)),
            pl.BlockSpec((1, tq, num_heads), lambda b, qi, ki: (b, qi, 0)),
        ),
        scratch_shapes=[
            pltpu.VMEM((num_heads, tq, 1), jnp.float32),
            pltpu.VMEM((num_heads, tq, 1), jnp.float32),
            pltpu.VMEM((num_heads, tq, head_size), jnp.float32),
        ],
        compiler_params=pltpu.CompilerParams(
            dimension_semantics=("parallel", "parallel", "arbitrary")),
    )(*inputs)


# ----------------------------------------------------------------------------
# Attention kernel #2: Sk-tiled head-averaged weights (exact exp(s - lse))
# ----------------------------------------------------------------------------
def _mha_weights_kernel(*refs, num_heads, head_size, compute_dtype, has_bias):
    # q_ref: (1, TQ, H); k_ref: (1, TKV, H); bias_ref: (1, 1, TKV) [optional]
    # lse_ref: (1, TQ, num_heads); w_ref: (1, TQ, TKV)
    if has_bias:
        q_ref, k_ref, bias_ref, lse_ref, w_ref = refs
        bias = bias_ref[0]
    else:
        q_ref, k_ref, lse_ref, w_ref = refs
        bias = None

    D = head_size
    dn = (((1,), (1,)), ((), ()))
    inv_nh = 1.0 / num_heads
    lse_all = lse_ref[0]                                # (TQ, num_heads)

    # Accumulate directly into the VMEM-resident output block (no live (TQ,TKV)
    # value carried across the unrolled head loop -> no guaranteed vreg spills).
    w_ref[...] = jnp.zeros(w_ref.shape, w_ref.dtype)
    for h in range(num_heads):
        sl = slice(h * D, (h + 1) * D)
        q_h = q_ref[0, :, sl].astype(compute_dtype)     # (TQ, D); scale pre-folded
        k_h = k_ref[0, :, sl].astype(compute_dtype)     # (TKV, D)
        s = lax.dot_general(q_h, k_h, dn, preferred_element_type=jnp.float32)
        if bias is not None:
            s = s + bias
        lse_h = lse_all[:, h:h + 1]                     # (TQ, 1)
        p = jnp.exp(s - lse_h)                          # exactly-normalized softmax
        # TODO(synk): nn.Dropout on attention probs is identity at inference.
        w_ref[0] += p * inv_nh


def pallas_attention_weights(q_in, k_in, bias, lse, *, num_heads, head_size,
                             compute_dtype=jnp.float32, tq=None, tkv=None):
    """Second pass: recompute scores tile-by-tile, normalize with the flash
    pass's lse, average over heads. Returns (B, Sq, Sk) f32."""
    q_arr, q_col = q_in
    k_arr, k_col = k_in
    B, Sq = q_arr.shape[0], q_arr.shape[1]
    Sk = k_arr.shape[1]
    H = num_heads * head_size
    tq = _tile(Sq, tq or ATT_TQ, 8)
    tkv = _tile(Sk, tkv or ATT_TKV, 128)
    grid = (B, Sq // tq, Sk // tkv)
    has_bias = bias is not None

    kernel = functools.partial(
        _mha_weights_kernel, num_heads=num_heads, head_size=head_size,
        compute_dtype=compute_dtype, has_bias=has_bias)

    in_specs = [
        pl.BlockSpec((1, tq, H), lambda b, qi, ki, c=q_col: (b, qi, c)),
        pl.BlockSpec((1, tkv, H), lambda b, qi, ki, c=k_col: (b, ki, c)),
    ]
    inputs = [q_arr, k_arr]
    if has_bias:
        in_specs.append(pl.BlockSpec((1, 1, tkv), lambda b, qi, ki: (b, 0, ki)))
        inputs.append(bias)
    in_specs.append(pl.BlockSpec((1, tq, num_heads), lambda b, qi, ki: (b, qi, 0)))
    inputs.append(lse)

    return pl.pallas_call(
        kernel,
        out_shape=jax.ShapeDtypeStruct((B, Sq, Sk), jnp.float32),
        grid=grid,
        in_specs=in_specs,
        out_specs=pl.BlockSpec((1, tq, tkv), lambda b, qi, ki: (b, qi, ki)),
        compiler_params=pltpu.CompilerParams(
            dimension_semantics=("parallel", "parallel", "parallel")),
    )(*inputs)


# ----------------------------------------------------------------------------
# Parameter prep (one-time, outside the per-call forward) + full forward pass
# ----------------------------------------------------------------------------
def init_params(key, num_heads, size):
    """Deterministic init mirroring the PyTorch __init__ (nn.Linear layout:
    weight (Out, In), bias (Out,))."""
    ks = jax.random.split(key, 8)
    bound = 1.0 / math.sqrt(size)
    uni = lambda kk, shape: jax.random.uniform(
        kk, shape, dtype=jnp.float32, minval=-bound, maxval=bound)
    return {
        "num_heads": num_heads,
        "k_w": uni(ks[0], (size, size)), "k_b": uni(ks[1], (size,)),
        "v_w": uni(ks[2], (size, size)), "v_b": uni(ks[3], (size,)),
        "q_w": uni(ks[4], (size, size)), "q_b": uni(ks[5], (size,)),
        "o_w": uni(ks[6], (size, size)), "o_b": uni(ks[7], (size,)),
        # TODO(synk): self.E / relative position encoding (skewing path) is only
        # used when use_relative_pos_enc=True; not implemented here.
    }


def prepare_params(params):
    """One-time prep: transpose weights to (In, Out), fold 1/sqrt(head_size)
    into the q projection, and pre-build fused QKV / KV projection weights."""
    nh = params["num_heads"]
    H = params["q_w"].shape[0]
    D = H // nh
    scale = 1.0 / math.sqrt(D)
    q_w = params["q_w"] * scale
    q_b = params["q_b"] * scale
    return {
        "num_heads": nh, "head_size": D,
        "q_wt": q_w.T, "q_b": q_b,
        "k_wt": params["k_w"].T, "k_b": params["k_b"],
        "v_wt": params["v_w"].T, "v_b": params["v_b"],
        "o_wt": params["o_w"].T, "o_b": params["o_b"],
        "qkv_wt": jnp.concatenate([q_w, params["k_w"], params["v_w"]], axis=0).T,
        "qkv_b": jnp.concatenate([q_b, params["k_b"], params["v_b"]], axis=0),
        "kv_wt": jnp.concatenate([params["k_w"], params["v_w"]], axis=0).T,
        "kv_b": jnp.concatenate([params["k_b"], params["v_b"]], axis=0),
    }


def multi_headed_attention(prep, k, v, q, mask=None, return_weights=False,
                           compute_dtype=jnp.float32):
    """Matches MultiHeadedAttention.forward (use_relative_pos_enc=False, eval).

    k, v, q: [batch, seq, hidden]; mask: [batch, 1, key_len] (bool/0-1) or None.
    Returns (output [B, Sq, hidden], head-averaged weights [B, Sq, Sk] or None)."""
    B, Sk, H = k.shape
    Sq = q.shape[1]
    nh, D = prep["num_heads"], prep["head_size"]
    assert H == nh * D

    # Fused-tensor BlockSpec indexing needs the last-dim block (H) to obey the
    # 128-lane layout rule; otherwise fall back to separate projections.
    can_pack = (H % 128 == 0)

    if (k is v) and (v is q) and can_pack:      # self-attention: one (H, 3H) matmul
        qkv = pallas_linear(q.reshape(B * Sq, H), prep["qkv_wt"], prep["qkv_b"],
                            compute_dtype=compute_dtype).reshape(B, Sq, 3 * H)
        q_in, k_in, v_in = (qkv, 0), (qkv, 1), (qkv, 2)
    elif (k is v) and can_pack:                 # shared encoder memory: fuse K/V
        kv = pallas_linear(k.reshape(B * Sk, H), prep["kv_wt"], prep["kv_b"],
                           compute_dtype=compute_dtype).reshape(B, Sk, 2 * H)
        q_p = pallas_linear(q.reshape(B * Sq, H), prep["q_wt"], prep["q_b"],
                            compute_dtype=compute_dtype).reshape(B, Sq, H)
        q_in, k_in, v_in = (q_p, 0), (kv, 0), (kv, 1)
    else:
        q_p = pallas_linear(q.reshape(B * Sq, H), prep["q_wt"], prep["q_b"],
                            compute_dtype=compute_dtype).reshape(B, Sq, H)
        k_p = pallas_linear(k.reshape(B * Sk, H), prep["k_wt"], prep["k_b"],
                            compute_dtype=compute_dtype).reshape(B, Sk, H)
        v_p = pallas_linear(v.reshape(B * Sk, H), prep["v_wt"], prep["v_b"],
                            compute_dtype=compute_dtype).reshape(B, Sk, H)
        q_in, k_in, v_in = (q_p, 0), (k_p, 0), (v_p, 0)

    # Mask -> additive bias (0 keep / NEG_INF masked); finite => no NaN even for
    # fully-masked rows (unlike torch masked_fill(-inf)). mask=None => bias-free
    # kernel variant (no zero-bias DMA / per-tile adds).
    if mask is None:
        bias = None
    else:
        bias = jnp.where(mask.astype(bool), 0.0, NEG_INF).astype(jnp.float32)

    ctx, lse = pallas_attention_flash(q_in, k_in, v_in, bias,
                                      num_heads=nh, head_size=D,
                                      compute_dtype=compute_dtype)

    if return_weights:
        avg_w = pallas_attention_weights(q_in, k_in, bias, lse,
                                         num_heads=nh, head_size=D,
                                         compute_dtype=compute_dtype)
    else:
        avg_w = None

    out = pallas_linear(ctx.reshape(B * Sq, H), prep["o_wt"], prep["o_b"],
                        compute_dtype=compute_dtype).reshape(B, Sq, H)
    return out, avg_w


def _reference_mha(params, k, v, q, mask, num_heads):
    """Pure-JAX reference of the PyTorch forward (for a sanity check)."""
    H = q.shape[-1]
    D = H // num_heads
    B, Sk, _ = k.shape
    Sq = q.shape[1]
    lin = lambda x, w, b: x @ w.T + b
    kp = lin(k, params["k_w"], params["k_b"])
    vp = lin(v, params["v_w"], params["v_b"])
    qp = lin(q, params["q_w"], params["q_b"])
    split = lambda x, S: x.reshape(B, S, num_heads, D).transpose(0, 2, 1, 3)
    kh, vh, qh = split(kp, Sk), split(vp, Sk), split(qp, Sq)
    scores = jnp.einsum("bhqd,bhkd->bhqk", qh, kh) / math.sqrt(D)
    if mask is not None:
        scores = jnp.where(mask[:, None, :, :].astype(bool), scores, -jnp.inf)
    w = jax.nn.softmax(scores, axis=-1)
    ctx = jnp.einsum("bhqk,bhkd->bhqd", w, vh)
    ctx = ctx.transpose(0, 2, 1, 3).reshape(B, Sq, H)
    out = ctx @ params["o_w"].T + params["o_b"]
    return out, w.sum(axis=1) / num_heads


if __name__ == "__main__":
    num_heads, size = 4, 128      # hidden multiple of 128 -> fused qkv path legal
    batch, seq = 2, 8

    key = jax.random.PRNGKey(0)
    kp, kx, kk_, kv_, kq_ = jax.random.split(key, 5)
    params = init_params(kp, num_heads, size)
    prep = prepare_params(params)

    # Case 1: self-attention (fused QKV), masked, head-averaged weights.
    x = jax.random.normal(kx, (batch, seq, size), dtype=jnp.float32)
    mask = jnp.ones((batch, 1, seq), dtype=bool)
    mask = mask.at[1, 0, -2:].set(False)      # mask last two keys of batch 1

    out, avg_w = multi_headed_attention(prep, x, x, x, mask=mask,
                                        return_weights=True)
    jax.block_until_ready(out)
    jax.block_until_ready(avg_w)
    assert out.shape == (batch, seq, size)
    assert avg_w.shape == (batch, seq, seq)

    ref_out, ref_w = _reference_mha(params, x, x, x, mask, num_heads)
    assert jnp.allclose(out, ref_out, atol=5e-2, rtol=5e-2), "output mismatch"
    assert jnp.allclose(avg_w, ref_w, atol=5e-2, rtol=5e-2), "weights mismatch"

    # Case 2: distinct k/v/q, no mask (bias-free kernels), bf16 MXU inputs.
    k_in = jax.random.normal(kk_, (batch, seq, size), dtype=jnp.float32)
    v_in = jax.random.normal(kv_, (batch, seq, size), dtype=jnp.float32)
    q_in = jax.random.normal(kq_, (batch, seq, size), dtype=jnp.float32)
    out2, w2 = multi_headed_attention(prep, k_in, v_in, q_in, mask=None,
                                      return_weights=False,
                                      compute_dtype=jnp.bfloat16)
    jax.block_until_ready(out2)
    assert out2.shape == (batch, seq, size)
    assert w2 is None

    # Case 3: cross-attention (k is v, fused KV projection), masked, f32.
    out3, _ = multi_headed_attention(prep, k_in, k_in, q_in, mask=mask,
                                     return_weights=False)
    jax.block_until_ready(out3)
    ref_out3, _ = _reference_mha(params, k_in, k_in, q_in, mask, num_heads)
    assert jnp.allclose(out3, ref_out3, atol=5e-2, rtol=5e-2), "cross-attn mismatch"

    print("KERNEL_OK")
</pallas_src>

<mosaic_0001>
module attributes {stable_mosaic.version = 11 : i64} {
  func.func @_linear_kernel_accum(%arg0: i32, %arg1: i32, %arg2: i32, %arg3: memref<16x128xf32, #tpu.memory_space<vmem>>, %arg4: memref<128x128xf32, #tpu.memory_space<vmem>>, %arg5: memref<1x128xf32, #tpu.memory_space<vmem>>, %arg6: memref<16x128xf32, #tpu.memory_space<vmem>>) attributes {dimension_semantics = [#tpu.dimension_semantics<parallel>, #tpu.dimension_semantics<parallel>, #tpu.dimension_semantics<arbitrary>], iteration_bounds = array<i64: 1, 3, 1>, scalar_prefetch = 0 : i64, scratch_operands = 0 : i64, tpu.core_type = #tpu.core_type<tc>, window_params = [{transform_indices = @transform_0, window_bounds = array<i64: 16, 128>}, {transform_indices = @transform_1, window_bounds = array<i64: 128, 128>}, {transform_indices = @transform_2, window_bounds = array<i64: 1, 128>}, {transform_indices = @transform_3, window_bounds = array<i64: 16, 128>}]} {
    %c0_i32 = arith.constant 0 : i32
    %0 = arith.cmpi eq, %arg2, %c0_i32 : i32
    %1 = arith.extui %0 : i1 to i32
    %c0_i32_0 = arith.constant 0 : i32
    %2 = arith.cmpi ne, %1, %c0_i32_0 : i32
    scf.if %2 {
      %cst_10 = arith.constant 0.000000e+00 : f32
      %12 = vector.broadcast %cst_10 : f32 to vector<16x128xf32>
      %c0_11 = arith.constant 0 : index
      %c0_12 = arith.constant 0 : index
      %13 = vector.load %arg6[%c0_11, %c0_12] : memref<16x128xf32, #tpu.memory_space<vmem>>, vector<16x128xf32>
      tpu.vector_store %arg6[%c0_11, %c0_12], %12 {strides = array<i32>} : memref<16x128xf32, #tpu.memory_space<vmem>>, vector<16x128xf32>,
    } else {
    }
    %c0 = arith.constant 0 : index
    %c0_1 = arith.constant 0 : index
    %3 = vector.load %arg6[%c0, %c0_1] : memref<16x128xf32, #tpu.memory_space<vmem>>, vector<16x128xf32>
    %c0_2 = arith.constant 0 : index
    %c0_3 = arith.constant 0 : index
    %4 = vector.load %arg3[%c0_2, %c0_3] : memref<16x128xf32, #tpu.memory_space<vmem>>, vector<16x128xf32>
    %c0_4 = arith.constant 0 : index
    %c0_5 = arith.constant 0 : index
    %5 = vector.load %arg4[%c0_4, %c0_5] : memref<128x128xf32, #tpu.memory_space<vmem>>, vector<128x128xf32>
    %cst = arith.constant dense<0.000000e+00> : vector<16x128xf32>
    %6 = tpu.matmul %4, %5, %cst {dimension_numbers = #tpu.dot_dimension_numbers<[1], [0], [0], [1], [0, 0, 1, 1], [], []>} : vector<16x128xf32>, vector<128x128xf32>, vector<16x128xf32> -> vector<16x128xf32>
    %7 = arith.addf %3, %6 : vector<16x128xf32>
    %c0_6 = arith.constant 0 : index
    %c0_7 = arith.constant 0 : index
    %8 = vector.load %arg6[%c0_6, %c0_7] : memref<16x128xf32, #tpu.memory_space<vmem>>, vector<16x128xf32>
    tpu.vector_store %arg6[%c0_6, %c0_7], %7 {strides = array<i32>} : memref<16x128xf32, #tpu.memory_space<vmem>>, vector<16x128xf32>,
    %c0_i32_8 = arith.constant 0 : i32
    %9 = arith.cmpi eq, %arg2, %c0_i32_8 : i32
    %10 = arith.extui %9 : i1 to i32
    %c0_i32_9 = arith.constant 0 : i32
    %11 = arith.cmpi ne, %10, %c0_i32_9 : i32
    scf.if %11 {
      %c0_10 = arith.constant 0 : index
      %c0_11 = arith.constant 0 : index
      %12 = vector.load %arg6[%c0_10, %c0_11] : memref<16x128xf32, #tpu.memory_space<vmem>>, vector<16x128xf32>
      %c0_12 = arith.constant 0 : index
      %c0_13 = arith.constant 0 : index
      %13 = vector.load %arg5[%c0_12, %c0_13] : memref<1x128xf32, #tpu.memory_space<vmem>>, vector<1x128xf32>
      %14 = vector.broadcast %13 : vector<1x128xf32> to vector<16x128xf32>
      %15 = arith.addf %12, %14 : vector<16x128xf32>
      %c0_14 = arith.constant 0 : index
      %c0_15 = arith.constant 0 : index
      %16 = vector.load %arg6[%c0_14, %c0_15] : memref<16x128xf32, #tpu.memory_space<vmem>>, vector<16x128xf32>
      tpu.vector_store %arg6[%c0_14, %c0_15], %15 {strides = array<i32>} : memref<16x128xf32, #tpu.memory_space<vmem>>, vector<16x128xf32>,
    } else {
    }
    return
  }
  func.func @transform_0(%arg0: i32, %arg1: i32, %arg2: i32) -> (i32, i32) {
    %c0_i32 = arith.constant 0 : i32
    return %arg0, %arg2 : i32, i32
  }
  func.func @transform_1(%arg0: i32, %arg1: i32, %arg2: i32) -> (i32, i32) {
    %c0_i32 = arith.constant 0 : i32
    return %arg2, %arg1 : i32, i32
  }
  func.func @transform_2(%arg0: i32, %arg1: i32, %arg2: i32) -> (i32, i32) {
    %c0_i32 = arith.constant 0 : i32
    %c0_i32_0 = arith.constant 0 : i32
    return %c0_i32, %arg1 : i32, i32
  }
  func.func @transform_3(%arg0: i32, %arg1: i32, %arg2: i32) -> (i32, i32) {
    %c0_i32 = arith.constant 0 : i32
    return %arg0, %arg1 : i32, i32
  }
}

</mosaic_0001>

<llo_original>
// kernel: tpu_custom_call.1
$region0: #{tpu_custom_call.1}
  #allocation0 [shape = 'u32[]', space=smem, size = 0x4, offset = 0x4, fixed_abs, tag = 'smem constant byte address 0x4 - core index']
  #allocation1 [shape = 'u32[144,128]{1,0:T(1,128)}', space=vmem, size = 0x12000, scoped, tag = 'internal scratch']
  %s0 = inlined_call_operand.hbm [shape: f32[16,128], index: 0, kind: input, shape index: {}]
  %s1 = inlined_call_operand.hbm [shape: f32[128,384], index: 1, kind: input, shape index: {}]
  %s2 = inlined_call_operand.vmem [shape: f32[1,384], index: 2, kind: input, shape index: {}]
  %s3 = inlined_call_operand.hbm [shape: f32[16,384], index: 3, kind: output, shape index: {}]
  %s4 = sld [smem:[#allocation0]]
  $region61: #{tpu_custom_call.1} parent=0
    _
  %s6 = ssub.s32 1, %s4
  %s7 = scalar_select 0, %s6, %s4
  $region1: #{tpu_custom_call.1} parent=0
    #allocation2 [shape = 'u8[8192]{0}', space=vmem, size = 0x2000, scoped, tag = 'input window, operand 0, single buffered']
    #allocation3 [shape = 's32[2]{0}', space=sflag, size = 0x8, scoped, tag = 'scoped memory for tpu_custom_call.1']
    #allocation4 [shape = 's32[2]{0}', space=sflag, size = 0x8, scoped, tag = 'scoped memory for tpu_custom_call.1']
    #allocation5 [shape = 'u8[131072]{0}', space=vmem, size = 0x20000, scoped, tag = 'input window, operand 1']
    #allocation6 [shape = 's32[2]{0}', space=sflag, size = 0x8, scoped, tag = 'scoped memory for tpu_custom_call.1']
    #allocation7 [shape = 'u8[16384]{0}', space=vmem, size = 0x4000, scoped, tag = 'output window, operand 0']
    %8 = vsyncpa [#allocation3], 0
    %9 = vsyncpa [#allocation6], 0
    %s10 = scalar_lea.sflag [#allocation6], 1
    %11 = vsyncpa %s10, 0
    %12 = vsyncpa [#allocation4], 0
    %s13 = scalar_lea.sflag [#allocation4], 1
    %14 = vsyncpa %s13, 0
    loop: start=0, step=1, limit=5
    $region2: #{tpu_custom_call.1} parent=1 // loop_pre_header
      _
    $region3: #{tpu_custom_call.1} parent=1 // loop_header
      %s16 = sphi 0, %s20
      %p17 = scmp.ge.s32.totalorder %s16, 5
      %s23 = sphi 0, %s42
      %s24 = sphi 0, %s38
      %s25 = sphi 0, %s34
      %s26 = sphi 0, %s23
      %s27 = sphi 0, %s24
      %s28 = sphi 0, %s25
      %s29 = sphi 0, %s26
      %s30 = sphi 0, %s27
      %s31 = sphi 0, %s28
      %s47 = sphi 0, %s49
      %s50 = sphi 0, %s47
      %s51 = sphi 0, %s50
      %s67 = sphi 0, %s51
      %s75 = sphi 0, %s77
      %s78 = sphi 0, %s75
      %s79 = sphi 0, %s78
      %s95 = sphi 0, %s79
      %s101 = sphi 0, %s103
      %s104 = sphi 0, %s101
      %s105 = sphi 0, %s104
      %s121 = sphi 0, %s105
      %s129 = sphi 0, %s131
      %s132 = sphi 0, %s129
      %s133 = sphi 0, %s132
      %s149 = sphi 0, %s133
    $region4: #{tpu_custom_call.1} parent=1 // loop_header_branch
      %19 = sbr.rel (%p17) target = $region8
    $region5: #{tpu_custom_call.1} parent=1 // loop_body
      %s21 = ssub.s32 %s16, 1
      %s22 = ssub.s32 %s16, 2
      %s32 = sadd.s32 1, %s25
      %p33 = scmp.ge.s32.totalorder %s32, 1
      %s34 = scalar_select %p33, 0, %s32
      %s35 = sadd.s32 1, %s24
      %s36 = scalar_select %p33, %s35, %s24
      %p37 = scmp.ge.s32.totalorder %s36, 3
      %s38 = scalar_select %p37, 0, %s36
      %s39 = sadd.s32 1, %s23
      %s40 = scalar_select %p37, %s39, %s23
      %p41 = scmp.ge.s32.totalorder %s40, 1
      %s42 = scalar_select %p41, 0, %s40
      %s43 = ssub.s32 %s23, %s42
      %s44 = ssub.s32 %s25, %s34
      %s45 = sor.u32 %s43, %s44
      %p46 = scmp.eq.s32.totalorder %s45, 0
      %s48 = sadd.s32 %s47, 1
      %s49 = scalar_select %p46, %s47, %s48
      %p52 = pneg %p46
      %p53 = scmp.eq.s32.totalorder %s16, 2
      %p54 = por %p52, %p53
      %p55 = scmp.ne.s32.totalorder %s47, %s50
      %p56 = scmp.eq.s32.totalorder %s16, 0
      %p57 = por %p55, %p56
      %p58 = scmp.ne.s32.totalorder %s47, %s50
      %p59 = scmp.eq.s32.totalorder %s21, 2
      %p60 = por %p58, %p59
      %p61 = scmp.ne.s32.totalorder %s50, %s51
      %p62 = scmp.eq.s32.totalorder %s21, 0
      %p63 = por %p61, %p62
      %p64 = scmp.ne.s32.totalorder %s50, %s51
      %p65 = scmp.eq.s32.totalorder %s22, 2
      %p66 = por %p64, %p65
      %p68 = scmp.ne.s32.totalorder %s51, %s67
      %p69 = scmp.eq.s32.totalorder %s22, 0
      %p70 = por %p68, %p69
      %s71 = ssub.s32 %s25, %s34
      %s72 = ssub.s32 %s24, %s38
      %s73 = sor.u32 %s71, %s72
      %p74 = scmp.eq.s32.totalorder %s73, 0
      %s76 = sadd.s32 %s75, 1
      %s77 = scalar_select %p74, %s75, %s76
      %p80 = pneg %p74
      %p81 = scmp.eq.s32.totalorder %s16, 2
      %p82 = por %p80, %p81
      %p83 = scmp.ne.s32.totalorder %s75, %s78
      %p84 = scmp.eq.s32.totalorder %s16, 0
      %p85 = por %p83, %p84
      %p86 = scmp.ne.s32.totalorder %s75, %s78
      %p87 = scmp.eq.s32.totalorder %s21, 2
      %p88 = por %p86, %p87
      %p89 = scmp.ne.s32.totalorder %s78, %s79
      %p90 = scmp.eq.s32.totalorder %s21, 0
      %p91 = por %p89, %p90
      %p92 = scmp.ne.s32.totalorder %s78, %s79
      %p93 = scmp.eq.s32.totalorder %s22, 2
      %p94 = por %p92, %p93
      %p96 = scmp.ne.s32.totalorder %s79, %s95
      %p97 = scmp.eq.s32.totalorder %s22, 0
      %p98 = por %p96, %p97
      %s99 = ssub.s32 %s24, %s38
      %p100 = scmp.eq.s32.totalorder %s99, 0
      %s102 = sadd.s32 %s101, 1
      %s103 = scalar_select %p100, %s101, %s102
      %p106 = pneg %p100
      %p107 = scmp.eq.s32.totalorder %s16, 2
      %p108 = por %p106, %p107
      %p109 = scmp.ne.s32.totalorder %s101, %s104
      %p110 = scmp.eq.s32.totalorder %s16, 0
      %p111 = por %p109, %p110
      %p112 = scmp.ne.s32.totalorder %s101, %s104
      %p113 = scmp.eq.s32.totalorder %s21, 2
      %p114 = por %p112, %p113
      %p115 = scmp.ne.s32.totalorder %s104, %s105
      %p116 = scmp.eq.s32.totalorder %s21, 0
      %p117 = por %p115, %p116
      %p118 = scmp.ne.s32.totalorder %s104, %s105
      %p119 = scmp.eq.s32.totalorder %s22, 2
      %p120 = por %p118, %p119
      %p122 = scmp.ne.s32.totalorder %s105, %s121
      %p123 = scmp.eq.s32.totalorder %s22, 0
      %p124 = por %p122, %p123
      %s125 = ssub.s32 %s23, %s42
      %s126 = ssub.s32 %s24, %s38
      %s127 = sor.u32 %s125, %s126
      %p128 = scmp.eq.s32.totalorder %s127, 0
      %s130 = sadd.s32 %s129, 1
      %s131 = scalar_select %p128, %s129, %s130
      %p134 = pneg %p128
      %p135 = scmp.eq.s32.totalorder %s16, 2
      %p136 = por %p134, %p135
      %p137 = scmp.ne.s32.totalorder %s129, %s132
      %p138 = scmp.eq.s32.totalorder %s16, 0
      %p139 = por %p137, %p138
      %p140 = scmp.ne.s32.totalorder %s129, %s132
      %p141 = scmp.eq.s32.totalorder %s21, 2
      %p142 = por %p140, %p141
      %p143 = scmp.ne.s32.totalorder %s132, %s133
      %p144 = scmp.eq.s32.totalorder %s21, 0
      %p145 = por %p143, %p144
      %p146 = scmp.ne.s32.totalorder %s132, %s133
      %p147 = scmp.eq.s32.totalorder %s22, 2
      %p148 = por %p146, %p147
      %p150 = scmp.ne.s32.totalorder %s133, %s149
      %p151 = scmp.eq.s32.totalorder %s22, 0
      %p152 = por %p150, %p151
      %p153 = scmp.le.s32.totalorder 1, %s16
      %p154 = scmp.lt.s32.totalorder %s16, 4
      %p155 = pnand %p153, %p154
      %p156 = pneg %p155
      // Predicated region
      $region9: #{tpu_custom_call.1} parent=5 // pred_check
        _
      $region10: #{tpu_custom_call.1} parent=5 // pred_check_branch
        %158 = sbr.rel (%p155) target = $region12
      $region11: #{tpu_custom_call.1} parent=5 // pred_region
        %s159 = ssub.s32 %s16, 1
        // Predicated region
        $region13: #{tpu_custom_call.1} parent=11 // pred_check
          %p160 = pneg %p63
        $region14: #{tpu_custom_call.1} parent=11 // pred_check_branch
          %162 = sbr.rel (%p160) target = $region16
        $region15: #{tpu_custom_call.1} parent=11 // pred_region
          %s163 = smul.u32 2, %s26
          %s165 = ssub.s32 256, 256
          %166 = vsyncadd [#allocation3], %s165
          %s167 = sadd.s32 %s28, %s163
          %s168 = smul.addr %s167, 128
          %s169 = scalar_lea.hbm %s0, %s168
          %s170 = sshll.u32 [#allocation2], 4
          %s171 = int_to_ptr.vmem [resolvable:$true] %s170
          %176 = dma.hbm_to_vmem [thread:$0]  %s169, 256, %s171, [#allocation3], 128, 128, 8
        $region16: #{tpu_custom_call.1} parent=11 // pred_fallthru
          _
      $region12: #{tpu_custom_call.1} parent=5 // pred_fallthru
        _
      %p177 = scmp.lt.s32.totalorder %s16, 3
      // Predicated region
      $region17: #{tpu_custom_call.1} parent=5 // pred_check
        %p178 = pneg %p177
      $region18: #{tpu_custom_call.1} parent=5 // pred_check_branch
        %180 = sbr.rel (%p178) target = $region20
      $region19: #{tpu_custom_call.1} parent=5 // pred_region
        // Predicated region
        $region21: #{tpu_custom_call.1} parent=19 // pred_check
          %p181 = pneg %p85
        $region22: #{tpu_custom_call.1} parent=19 // pred_check_branch
          %183 = sbr.rel (%p181) target = $region24
        $region23: #{tpu_custom_call.1} parent=19 // pred_region
          %s184 = sand.u32 %s75, 1
          %s185 = scalar_lea.sflag [#allocation6], %s184
          %s186 = sand.u32 %s75, 1
          %s187 = smul.addr %s186, 128
          %s188 = scalar_lea.vmem [#allocation5], %s187
          %s189 = smul.u32 16, %s25
          %s191 = ssub.s32 2048, 2048
          %192 = vsyncadd %s185, %s191
          %s193 = smul.addr %s189, 3
          %s194 = sadd.s32 %s24, %s193
          %s195 = smul.addr %s194, 128
          %s196 = scalar_lea.hbm %s1, %s195
          %s197 = sshll.u32 %s188, 4
          %s198 = int_to_ptr.vmem [resolvable:$true] %s197
          %203 = dma.hbm_to_vmem [thread:$0]  %s196, 2048, %s198, %s185, 384, 128, 8
        $region24: #{tpu_custom_call.1} parent=19 // pred_fallthru
          _
        // Predicated region
        $region25: #{tpu_custom_call.1} parent=19 // pred_check
          %p204 = pneg %p111
        $region26: #{tpu_custom_call.1} parent=19 // pred_check_branch
          %206 = sbr.rel (%p204) target = $region28
        $region27: #{tpu_custom_call.1} parent=19 // pred_region
          %p207 = scmp.lt.s32.totalorder %s24, 2
          %s208 = scalar_select %p207, %s24, 2
          %s209 = scalar_lea.vmem %s2, %s208
        $region28: #{tpu_custom_call.1} parent=19 // pred_fallthru
          _
      $region20: #{tpu_custom_call.1} parent=5 // pred_fallthru
        _
      %p210 = scmp.le.s32.totalorder 1, %s16
      %p211 = scmp.lt.s32.totalorder %s16, 4
      %p212 = pnand %p210, %p211
      %p213 = pneg %p212
      // Predicated region
      $region29: #{tpu_custom_call.1} parent=5 // pred_check
        _
      $region30: #{tpu_custom_call.1} parent=5 // pred_check_branch
        %215 = sbr.rel (%p212) target = $region32
      $region31: #{tpu_custom_call.1} parent=5 // pred_region
        %s216 = ssub.s32 %s16, 1
        // Predicated region
        $region33: #{tpu_custom_call.1} parent=31 // pred_check
          %p217 = pneg %p63
        $region34: #{tpu_custom_call.1} parent=31 // pred_check_branch
          %219 = sbr.rel (%p217) target = $region36
        $region35: #{tpu_custom_call.1} parent=31 // pred_region
          %220 = dma.done [#allocation3], 256
        $region36: #{tpu_custom_call.1} parent=31 // pred_fallthru
          _
        %s221 = sand.u32 %s78, 1
        %s222 = scalar_lea.sflag [#allocation6], %s221
        %s223 = sand.u32 %s78, 1
        %s224 = smul.addr %s223, 128
        %s225 = scalar_lea.vmem [#allocation5], %s224
        // Predicated region
        $region37: #{tpu_custom_call.1} parent=31 // pred_check
          %p226 = pneg %p91
        $region38: #{tpu_custom_call.1} parent=31 // pred_check_branch
          %228 = sbr.rel (%p226) target = $region40
        $region39: #{tpu_custom_call.1} parent=31 // pred_region
          %229 = dma.done %s222, 2048
        $region40: #{tpu_custom_call.1} parent=31 // pred_fallthru
          _
        %p230 = pneg %p63
        %p231 = pneg %p60
        %s232 = sand.u32 %s78, 1
        %s233 = scalar_lea.sflag [#allocation6], %s232
        %s234 = sand.u32 %s78, 1
        %s235 = smul.addr %s234, 128
        %s236 = scalar_lea.vmem [#allocation5], %s235
        %p237 = pneg %p91
        %p238 = pneg %p88
        %p239 = scmp.lt.s32.totalorder %s27, 2
        %s240 = scalar_select %p239, %s27, 2
        %s241 = scalar_lea.vmem %s2, %s240
        %p242 = pneg %p117
        %p243 = pneg %p114
        %p244 = pneg %p145
        %p245 = pneg %p142
        %s246 = sand.u32 %s132, 1
        %s247 = scalar_lea.sflag [#allocation4], %s246
        %s248 = sand.u32 %s132, 1
        %s249 = smul.addr %s248, 16
        %s250 = scalar_lea.vmem [#allocation7], %s249
        %s251 = smul.u32 2, %s26
        %s252 = smul.u32 16, %s28
        %p253 = scmp.lt.s32.totalorder %s27, 2
        %s254 = scalar_select %p253, %s27, 2
        %s255 = scalar_lea.vmem %s2, %s254
        %s256 = smul.u32 2, %s26
        %p257 = scmp.eq.s32.totalorder %s28, 0
        // Predicated region
        $region41: #{tpu_custom_call.1} parent=31 // pred_check
          %p258 = pneg %p257
        $region42: #{tpu_custom_call.1} parent=31 // pred_check_branch
          %260 = sbr.rel (%p258) target = $region44
        $region43: #{tpu_custom_call.1} parent=31 // pred_region
          %261 = vst [vmem:[%s250] sm:$0xff] 0.0
          %262 = vst [vmem:[%s250 + $0x8] sm:$0xff] 0.0
        $region44: #{tpu_custom_call.1} parent=31 // pred_fallthru
          _
        %v263 = vld [vmem:[%s250] sm:$0xff]
        %v264 = vld [vmem:[%s250 + $0x8] sm:$0xff]
        %v265 = vld [vmem:[#allocation2] sm:$0xff]
        %v266 = vld [vmem:[#allocation2 + $0x8] sm:$0xff]
        %v267 = vld [vmem:[%s225] sm:$0xff]
        %v268 = vld [vmem:[%s225 + $0x8] sm:$0xff]
        %v269 = vld [vmem:[%s225 + $0x10] sm:$0xff]
        %v270 = vld [vmem:[%s225 + $0x18] sm:$0xff]
        %v271 = vld [vmem:[%s225 + $0x20] sm:$0xff]
        %v272 = vld [vmem:[%s225 + $0x28] sm:$0xff]
        %v273 = vld [vmem:[%s225 + $0x30] sm:$0xff]
        %v274 = vld [vmem:[%s225 + $0x38] sm:$0xff]
        %v275 = vld [vmem:[%s225 + $0x40] sm:$0xff]
        %v276 = vld [vmem:[%s225 + $0x48] sm:$0xff]
        %v277 = vld [vmem:[%s225 + $0x50] sm:$0xff]
        %v278 = vld [vmem:[%s225 + $0x58] sm:$0xff]
        %v279 = vld [vmem:[%s225 + $0x60] sm:$0xff]
        %v280 = vld [vmem:[%s225 + $0x68] sm:$0xff]
        %v281 = vld [vmem:[%s225 + $0x70] sm:$0xff]
        %v282 = vld [vmem:[%s225 + $0x78] sm:$0xff]
        %283 = vmatprep.subr.mxu0 0.0
        %284 = vmatpush1.msra.mxu0 %v267
        %285 = vmatprep.subr.mxu0 0.0
        %286 = vmatpush1.msra.mxu0 %v268
        %287 = vmatprep.subr.mxu0 0.0
        %288 = vmatpush1.msra.mxu0 %v269
        %289 = vmatprep.subr.mxu0 0.0
        %290 = vmatpush1.msra.mxu0 %v270
        %291 = vmatprep.subr.mxu0 0.0
        %292 = vmatpush1.msra.mxu0 %v271
        %293 = vmatprep.subr.mxu0 0.0
        %294 = vmatpush1.msra.mxu0 %v272
        %295 = vmatprep.subr.mxu0 0.0
        %296 = vmatpush1.msra.mxu0 %v273
        %297 = vmatprep.subr.mxu0 0.0
        %298 = vmatpush1.msra.mxu0 %v274
        %299 = vmatprep.subr.mxu0 0.0
        %300 = vmatpush1.msra.mxu0 %v275
        %301 = vmatprep.subr.mxu0 0.0
        %302 = vmatpush1.msra.mxu0 %v276
        %303 = vmatprep.subr.mxu0 0.0
        %304 = vmatpush1.msra.mxu0 %v277
        %305 = vmatprep.subr.mxu0 0.0
        %306 = vmatpush1.msra.mxu0 %v278
        %307 = vmatprep.subr.mxu0 0.0
        %308 = vmatpush1.msra.mxu0 %v279
        %309 = vmatprep.subr.mxu0 0.0
        %310 = vmatpush1.msra.mxu0 %v280
        %311 = vmatprep.subr.mxu0 0.0
        %312 = vmatpush1.msra.mxu0 %v281
        %313 = vmatprep.subr.mxu0 0.0
        %314 = vmatpush1.msra.mxu0 %v282
        %315 = vmatprep.subr.mxu0 0.0
        %316 = vmatpush1.msra.mxu0 0.0
        %317 = vmatprep.subr.mxu0 0.0
        %318 = vmatpush1.msra.mxu0 0.0
        %319 = vmatprep.subr.mxu0 0.0
        %320 = vmatpush1.msra.mxu0 0.0
        %321 = vmatprep.subr.mxu0 0.0
        %322 = vmatpush1.msra.mxu0 0.0
        %323 = vmatprep.subr.mxu0 0.0
        %324 = vmatpush1.msra.mxu0 0.0
        %325 = vmatprep.subr.mxu0 0.0
        %326 = vmatpush1.msra.mxu0 0.0
        %327 = vmatprep.subr.mxu0 0.0
        %328 = vmatpush1.msra.mxu0 0.0
        %329 = vmatprep.subr.mxu0 0.0
        %330 = vmatpush1.msra.mxu0 0.0
        %331 = vmatprep.subr.mxu0 0.0
        %332 = vmatpush1.msra.mxu0 0.0
        %333 = vmatprep.subr.mxu0 0.0
        %334 = vmatpush1.msra.mxu0 0.0
        %335 = vmatprep.subr.mxu0 0.0
        %336 = vmatpush1.msra.mxu0 0.0
        %337 = vmatprep.subr.mxu0 0.0
        %338 = vmatpush1.msra.mxu0 0.0
        %339 = vmatprep.subr.mxu0 0.0
        %340 = vmatpush1.msra.mxu0 0.0
        %341 = vmatprep.subr.mxu0 0.0
        %342 = vmatpush1.msra.mxu0 0.0
        %343 = vmatprep.subr.mxu0 0.0
        %344 = vmatpush1.msra.mxu0 0.0
        %345 = vmatprep.subr.mxu0 0.0
        %346 = vmatpush1.msra.mxu0 0.0
        %347 = vmatprep.mubr.f32.mxu0 0.0
        %348 = vmatmul.mubr.f32.gmra.mrb[0].mxu0 %v265
        %v349 = vpop.f32.mrb[0].mxu0
        %v350 = vadd.f32 0.0, %v349
        %v351 = vpop.f32.mrb[0].mxu0
        %352 = vmatprep.mubr.f32.mxu0 0.0
        %353 = vmatmul.mubr.f32.gmra.mrb[0].mxu0 %v266
        %v354 = vpop.f32.mrb[0].mxu0
        %v355 = vadd.f32 0.0, %v354
        %v356 = vpop.f32.mrb[0].mxu0
        %357 = vdwg.mxu0
        %v358 = vadd.f32 %v263, %v350
        %v359 = vadd.f32 %v264, %v355
        %360 = vst [vmem:[%s250] sm:$0xff] %v358
        %361 = vst [vmem:[%s250 + $0x8] sm:$0xff] %v359
        // Predicated region
        $region45: #{tpu_custom_call.1} parent=31 // pred_check
          %p362 = pneg %p257
        $region46: #{tpu_custom_call.1} parent=31 // pred_check_branch
          %364 = sbr.rel (%p362) target = $region48
        $region47: #{tpu_custom_call.1} parent=31 // pred_region
          %v365 = vld [vmem:[%s250] sm:$0xff]
          %v366 = vld [vmem:[%s250 + $0x8] sm:$0xff]
          %v367 = vld [vmem:[%s255] sm:$0x1]
          %v369 = vlaneseq
          %v370 = vshrl.u32 %v369, 7
          %v371 = vsub.s32 0, %v370
          %v372 = vrot.slane %v367, %v371
          %v374 = vadd.f32 %v365, %v372
          %v375 = vadd.f32 %v366, %v372
          %376 = vst [vmem:[%s250] sm:$0xff] %v374
          %377 = vst [vmem:[%s250 + $0x8] sm:$0xff] %v375
        $region48: #{tpu_custom_call.1} parent=31 // pred_fallthru
          _
        %s378 = sand.u32 %s132, 1
        %s379 = scalar_lea.sflag [#allocation4], %s378
        %s380 = sand.u32 %s132, 1
        %s381 = smul.addr %s380, 16
        %s382 = scalar_lea.vmem [#allocation7], %s381
        // Predicated region
        $region49: #{tpu_custom_call.1} parent=31 // pred_check
          %p383 = pneg %p142
        $region50: #{tpu_custom_call.1} parent=31 // pred_check_branch
          %385 = sbr.rel (%p383) target = $region52
        $region51: #{tpu_custom_call.1} parent=31 // pred_region
          %s386 = smul.u32 2, %s26
          %s388 = ssub.s32 256, 256
          %389 = vsyncadd %s379, %s388
          %s390 = smul.addr %s386, 3
          %s391 = sadd.s32 %s27, %s390
          %s392 = smul.addr %s391, 128
          %s393 = scalar_lea.hbm %s3, %s392
          %s394 = sshll.u32 %s382, 4
          %s395 = int_to_ptr.vmem [resolvable:$true] %s394
          %400 = dma.vmem_to_hbm [thread:$0]  %s395, 256, %s393, %s379, 128, 384, 8
        $region52: #{tpu_custom_call.1} parent=31 // pred_fallthru
          _
      $region32: #{tpu_custom_call.1} parent=5 // pred_fallthru
        _
      %p401 = scmp.le.s32.totalorder 2, %s16
      // Predicated region
      $region53: #{tpu_custom_call.1} parent=5 // pred_check
        %p402 = pneg %p401
      $region54: #{tpu_custom_call.1} parent=5 // pred_check_branch
        %404 = sbr.rel (%p402) target = $region56
      $region55: #{tpu_custom_call.1} parent=5 // pred_region
        %s405 = ssub.s32 %s16, 2
        // Predicated region
        $region57: #{tpu_custom_call.1} parent=55 // pred_check
          %p406 = pneg %p148
        $region58: #{tpu_custom_call.1} parent=55 // pred_check_branch
          %408 = sbr.rel (%p406) target = $region60
        $region59: #{tpu_custom_call.1} parent=55 // pred_region
          %s409 = sand.u32 %s133, 1
          %s410 = scalar_lea.sflag [#allocation4], %s409
          %s411 = sand.u32 %s133, 1
          %s412 = smul.addr %s411, 16
          %s413 = scalar_lea.vmem [#allocation7], %s412
          %414 = dma.done %s410, 256
        $region60: #{tpu_custom_call.1} parent=55 // pred_fallthru
          _
      $region56: #{tpu_custom_call.1} parent=5 // pred_fallthru
        _
    $region6: #{tpu_custom_call.1} parent=1 // loop_footer
      %s20 = sadd.s32 1, %s16
    $region7: #{tpu_custom_call.1} parent=1 // loop_footer_branch
      %15 = sbr.rel target = $region3
    $region8: #{tpu_custom_call.1} parent=1 // loop_exit
      _
    %415 = vsyncpa [#allocation3], 1
    %s416 = scalar_lea.sflag [#allocation3], 1
    %417 = vsyncpa %s416, 1
    %418 = vsyncpa [#allocation6], 1
    %s419 = scalar_lea.sflag [#allocation6], 1
    %420 = vsyncpa %s419, 1
    %421 = vsyncpa [#allocation4], 1
    %s422 = scalar_lea.sflag [#allocation4], 1
    %423 = vsyncpa %s422, 1

</llo_original>
